<compile_context>
chip_gen: v6e
topology: v6e:2x2x1
jax: 0.10.0
libtpu: 0.0.40
codegen_flags: <defaults>
</compile_context>

<pallas_src>
import functools

import jax
import jax.numpy as jnp
from jax.experimental import pallas as pl
from jax.experimental.pallas import tpu as pltpu


def _mix_bits_u32(idx_u32, seed_u32):
    """lowbias32-style stateless hash -> pseudo-uniform uint32 (interpret fallback)."""
    x = idx_u32 + seed_u32 * jnp.uint32(0x9E3779B9)
    x = x ^ (x >> 16)
    x = x * jnp.uint32(0x7FEB352D)
    x = x ^ (x >> 15)
    x = x * jnp.uint32(0x846CA68B)
    x = x ^ (x >> 16)
    return x


def _attn_dropout_kernel(seed_ref, q_ref, k_ref, v_ref, o_ref, *,
                         inv_scale_factor, dropout_p, training,
                         block_b, block_q, seq_q, use_hw_prng):
    # Blocks: q (BB, BQ, D), k (BB, Lk, D), v (BB, Lk, Dv), out (BB, BQ, Dv).
    q = q_ref[...]
    k = k_ref[...]
    v = v_ref[...]

    # Fold 1/inv_scale_factor into Q (touches Lq*D elements, not Lq*Lk scores).
    q = q * jnp.asarray(1.0 / inv_scale_factor, dtype=q.dtype)

    # scores = q @ k^T, contracting the shared last dim (no transposed-K copy).
    s = jnp.einsum("bqd,bkd->bqk", q, k, preferred_element_type=jnp.float32)

    # Numerically stable softmax over the last dim; the reciprocal of the
    # narrow (BB,BQ,1) column goes to the EUP (approx) instead of a VALU divide.
    m = jnp.max(s, axis=-1, keepdims=True)
    e = jnp.exp(s - m)
    denom = jnp.sum(e, axis=-1, keepdims=True)
    p = e * pl.reciprocal(denom, approx=True)

    # Inverted dropout, matching torch.nn.Dropout(train) keep-prob/scaling.
    # TODO(synk): RNG stream intentionally differs from PyTorch's dropout RNG;
    #             only the keep-probability / scaling semantics match.
    if training and dropout_p >= 1.0:
        # torch.nn.Dropout(p=1.0) returns zeros.
        p = jnp.zeros_like(p)
    elif training and dropout_p > 0.0:
        BB, BQ, Lk = p.shape
        keep_scale = jnp.float32(1.0 / (1.0 - dropout_p))
        # P(drop) = threshold / 2^32 = dropout_p, tested on raw uint32 bits.
        threshold = jnp.uint32(min(int(round(dropout_p * 2.0 ** 32)), 2 ** 32 - 1))
        if use_hw_prng:
            # Hardware PRNG: one stream per (batch-block, q-block) grid point.
            lin = pl.program_id(0) * pl.num_programs(1) + pl.program_id(1)
            pltpu.prng_seed(seed_ref[0] + lin)
            bits = pltpu.prng_random_bits((BB * BQ, Lk))
            bits = bits.astype(jnp.uint32).reshape(BB, BQ, Lk)
        else:
            # Interpret-mode fallback: stateless hash of a flat element index
            # built from narrow iotas (row base (BB,BQ,1) + lane iota (1,1,Lk)).
            seed_u32 = seed_ref[0].astype(jnp.uint32)
            b_off = (pl.program_id(0) * block_b).astype(jnp.uint32)
            q_off = (pl.program_id(1) * block_q).astype(jnp.uint32)
            bi = jax.lax.broadcasted_iota(jnp.int32, (BB, 1, 1), 0).astype(jnp.uint32)
            qi = jax.lax.broadcasted_iota(jnp.int32, (1, BQ, 1), 1).astype(jnp.uint32)
            ki = jax.lax.broadcasted_iota(jnp.int32, (1, 1, Lk), 2).astype(jnp.uint32)
            row = ((b_off + bi) * jnp.uint32(seq_q) + (q_off + qi)) * jnp.uint32(Lk)
            bits = _mix_bits_u32(row + ki, seed_u32)
        keep = bits >= threshold
        p = jnp.where(keep, p * keep_scale, 0.0)

    # output = dropout(softmax(scores)) @ value
    out = jnp.einsum("bqk,bkv->bqv", p.astype(v.dtype), v,
                     preferred_element_type=jnp.float32)
    o_ref[...] = out.astype(o_ref.dtype)


def sdpa_dropout(query, key, value, inv_scale_factor, *,
                 dropout_p=0.2, training=True, seed=0,
                 block_b=None, block_q=None, use_hw_prng=None,
                 interpret=False):
    B, Lq, D = query.shape
    Bk, Lk, Dk = key.shape
    Bv, Lk2, Dv = value.shape
    assert D == Dk and Lk == Lk2 and B == Bk == Bv

    if use_hw_prng is None:
        use_hw_prng = (not interpret) and jax.devices()[0].platform == "tpu"

    # Batch blocking: amortize the ~0.35us/grid-step overhead over several
    # batch entries (sweepable; footprint at these sizes is tiny vs. VMEM).
    if block_b is None:
        block_b = min(B, 32)
    BB = block_b
    nb = pl.cdiv(B, BB)

    # Query blocking: only split Lq when the batch grid alone would leave a
    # v7x megacore half idle (needs >= 2 parallel grid steps).
    if block_q is None:
        if nb >= 2 or Lq <= 8:
            block_q = Lq
        else:
            half = -(-Lq // 2)                       # ceil(Lq / 2)
            block_q = min(Lq, -(-half // 8) * 8)     # round up to sublane multiple
    BQ = block_q
    nq = pl.cdiv(Lq, BQ)

    kernel = functools.partial(
        _attn_dropout_kernel,
        inv_scale_factor=float(inv_scale_factor),
        dropout_p=float(dropout_p),
        training=bool(training),
        block_b=BB,
        block_q=BQ,
        seq_q=Lq,
        use_hw_prng=bool(use_hw_prng),
    )

    # Runtime seed lives in SMEM (scalar prefetch): a fresh seed every training
    # step does NOT force a Mosaic recompile.
    seed_arr = jnp.array([int(seed) & 0x7FFFFFFF], dtype=jnp.int32)

    grid_spec = pltpu.PrefetchScalarGridSpec(
        num_scalar_prefetch=1,
        grid=(nb, nq),
        in_specs=[
            pl.BlockSpec((BB, BQ, D), lambda b, q, seed: (b, q, 0)),
            pl.BlockSpec((BB, Lk, D), lambda b, q, seed: (b, 0, 0)),
            pl.BlockSpec((BB, Lk, Dv), lambda b, q, seed: (b, 0, 0)),
        ],
        out_specs=pl.BlockSpec((BB, BQ, Dv), lambda b, q, seed: (b, q, 0)),
    )

    # TODO(synk): for production-scale Lq/Lk add an 'arbitrary' Lk reduction
    #             axis (flash-style online softmax) to keep the (BQ, Lk) score
    #             tile inside v7x's 64 MiB VMEM, and fold heads so Dv >= 128 to
    #             make the output stores lane-dense (avoid masked vst.msk).
    return pl.pallas_call(
        kernel,
        out_shape=jax.ShapeDtypeStruct((B, Lq, Dv), query.dtype),
        grid_spec=grid_spec,
        compiler_params=pltpu.CompilerParams(
            dimension_semantics=("parallel", "parallel")),
        interpret=interpret,
    )(seed_arr, query, key, value)


def sdpa_reference(query, key, value, inv_scale_factor):
    """Pure-JAX reference (dropout disabled) for a sanity check."""
    qk = jnp.einsum("bqd,bkd->bqk", query, key) / inv_scale_factor
    p = jax.nn.softmax(qk, axis=-1)
    return jnp.einsum("bqk,bkd->bqd", p, value)


if __name__ == "__main__":
    # Shapes consistent with the module's example inputs:
    # query (1, 30, 4), key (1, 40, 4), value (1, 40, 8)
    rng = jax.random.PRNGKey(0)
    kq, kk, kv = jax.random.split(rng, 3)
    query = jax.random.normal(kq, (1, 30, 4), dtype=jnp.float32)
    key = jax.random.normal(kk, (1, 40, 4), dtype=jnp.float32)
    value = jax.random.normal(kv, (1, 40, 8), dtype=jnp.float32)
    inv_scale_factor = 1.0

    # Training mode (dropout active), as in the PyTorch module's default state.
    out_train = sdpa_dropout(query, key, value, inv_scale_factor,
                             dropout_p=0.2, training=True, seed=1234)
    out_train = jax.block_until_ready(out_train)
    assert out_train.shape == (1, 30, 8)
    assert bool(jnp.all(jnp.isfinite(out_train)))

    # Re-run with a different seed: same compiled kernel (seed is an SMEM
    # runtime scalar), different dropout mask.
    out_train2 = sdpa_dropout(query, key, value, inv_scale_factor,
                              dropout_p=0.2, training=True, seed=5678)
    out_train2 = jax.block_until_ready(out_train2)
    assert out_train2.shape == (1, 30, 8)

    # Eval mode (dropout = identity) must match the pure-JAX reference up to
    # the approx (EUP) reciprocal used in the softmax epilogue.
    out_eval = sdpa_dropout(query, key, value, inv_scale_factor,
                            dropout_p=0.2, training=False)
    ref = sdpa_reference(query, key, value, inv_scale_factor)
    out_eval = jax.block_until_ready(out_eval)
    assert jnp.allclose(out_eval, ref, atol=2e-3, rtol=2e-3)

    print("KERNEL_OK")
</pallas_src>

<mosaic_0001>
module attributes {stable_mosaic.version = 11 : i64} {
  func.func @_attn_dropout_kernel(%arg0: i32, %arg1: i32, %arg2: memref<1xi32, #tpu.memory_space<smem>>, %arg3: memref<1x16x4xf32, #tpu.memory_space<vmem>>, %arg4: memref<1x40x4xf32, #tpu.memory_space<vmem>>, %arg5: memref<1x40x8xf32, #tpu.memory_space<vmem>>, %arg6: memref<1x16x8xf32, #tpu.memory_space<vmem>>) attributes {dimension_semantics = [#tpu.dimension_semantics<parallel>, #tpu.dimension_semantics<parallel>], iteration_bounds = array<i64: 1, 2>, scalar_prefetch = 1 : i64, scratch_operands = 0 : i64, tpu.core_type = #tpu.core_type<tc>, window_params = [{transform_indices = @transform_0, window_bounds = array<i64: 1, 16, 4>}, {transform_indices = @transform_1, window_bounds = array<i64: 1, 40, 4>}, {transform_indices = @transform_2, window_bounds = array<i64: 1, 40, 8>}, {transform_indices = @transform_3, window_bounds = array<i64: 1, 16, 8>}]} {
    %c0 = arith.constant 0 : index
    %c0_0 = arith.constant 0 : index
    %c0_1 = arith.constant 0 : index
    %0 = vector.load %arg3[%c0, %c0_0, %c0_1] : memref<1x16x4xf32, #tpu.memory_space<vmem>>, vector<1x16x4xf32>
    %c0_2 = arith.constant 0 : index
    %c0_3 = arith.constant 0 : index
    %c0_4 = arith.constant 0 : index
    %1 = vector.load %arg4[%c0_2, %c0_3, %c0_4] : memref<1x40x4xf32, #tpu.memory_space<vmem>>, vector<1x40x4xf32>
    %c0_5 = arith.constant 0 : index
    %c0_6 = arith.constant 0 : index
    %c0_7 = arith.constant 0 : index
    %2 = vector.load %arg5[%c0_5, %c0_6, %c0_7] : memref<1x40x8xf32, #tpu.memory_space<vmem>>, vector<1x40x8xf32>
    %cst = arith.constant 1.000000e+00 : f32
    %3 = vector.broadcast %cst : f32 to vector<1x16x4xf32>
    %4 = arith.mulf %0, %3 : vector<1x16x4xf32>
    "tpu.trace_start"() <{level = 10 : i32, message = "bqd,bkd->bqk"}> : () -> ()
    %cst_8 = arith.constant dense<0.000000e+00> : vector<1x16x40xf32>
    %5 = tpu.matmul %4, %1, %cst_8 {dimension_numbers = #tpu.dot_dimension_numbers<[2], [2], [1], [1], [0, 0, 0, 1, 1, 1], [0], [0]>} : vector<1x16x4xf32>, vector<1x40x4xf32>, vector<1x16x40xf32> -> vector<1x16x40xf32>
    "tpu.trace_stop"() : () -> ()
    %cst_9 = arith.constant dense<0xFF800000> : vector<1x16xf32>
    %6 = vector.multi_reduction <maximumf>, %5, %cst_9 [2] : vector<1x16x40xf32> to vector<1x16xf32>
    %7 = vector.shape_cast %6 : vector<1x16xf32> to vector<1x16x1xf32>
    %8 = vector.broadcast %7 : vector<1x16x1xf32> to vector<1x16x40xf32>
    %9 = arith.subf %5, %8 : vector<1x16x40xf32>
    %10 = math.exp %9 : vector<1x16x40xf32>
    %cst_10 = arith.constant dense<0.000000e+00> : vector<1x16xf32>
    %11 = vector.multi_reduction <add>, %10, %cst_10 [2] : vector<1x16x40xf32> to vector<1x16xf32>
    %12 = vector.shape_cast %11 : vector<1x16xf32> to vector<1x16x1xf32>
    %13 = tpu.reciprocal %12 {approx = true} : vector<1x16x1xf32> -> vector<1x16x1xf32>
    %14 = vector.broadcast %13 : vector<1x16x1xf32> to vector<1x16x40xf32>
    %15 = arith.mulf %10, %14 : vector<1x16x40xf32>
    %c0_11 = arith.constant 0 : index
    %16 = memref.load %arg2[%c0_11] : memref<1xi32, #tpu.memory_space<smem>>
    %c1_i32 = arith.constant 1 : i32
    %17 = arith.muli %arg0, %c1_i32 : i32
    %c16_i32 = arith.constant 16 : i32
    %18 = arith.muli %arg1, %c16_i32 : i32
    %19 = tpu.iota {dimensions = array<i32: 0>} : vector<1x1x1xi32>
    %20 = tpu.iota {dimensions = array<i32: 1>} : vector<1x16x1xi32>
    %21 = tpu.iota {dimensions = array<i32: 2>} : vector<1x1x40xi32>
    %22 = vector.broadcast %17 : i32 to vector<1x1x1xi32>
    %23 = arith.addi %22, %19 : vector<1x1x1xi32>
    %c30_i32 = arith.constant 30 : i32
    %24 = vector.broadcast %c30_i32 : i32 to vector<1x1x1xi32>
    %25 = arith.muli %23, %24 : vector<1x1x1xi32>
    %26 = vector.broadcast %18 : i32 to vector<1x16x1xi32>
    %27 = arith.addi %26, %20 : vector<1x16x1xi32>
    %28 = vector.broadcast %25 : vector<1x1x1xi32> to vector<1x16x1xi32>
    %29 = arith.addi %28, %27 : vector<1x16x1xi32>
    %c40_i32 = arith.constant 40 : i32
    %30 = vector.broadcast %c40_i32 : i32 to vector<1x16x1xi32>
    %31 = arith.muli %29, %30 : vector<1x16x1xi32>
    %32 = vector.broadcast %31 : vector<1x16x1xi32> to vector<1x16x40xi32>
    %33 = vector.broadcast %21 : vector<1x1x40xi32> to vector<1x16x40xi32>
    %34 = arith.addi %32, %33 : vector<1x16x40xi32>
    %c-1640531527_i32 = arith.constant -1640531527 : i32
    %35 = arith.muli %16, %c-1640531527_i32 : i32
    %36 = vector.broadcast %35 : i32 to vector<1x16x40xi32>
    %37 = arith.addi %34, %36 : vector<1x16x40xi32>
    %c16_i32_12 = arith.constant 16 : i32
    %38 = vector.broadcast %c16_i32_12 : i32 to vector<1x16x40xi32>
    %39 = arith.shrui %37, %38 : vector<1x16x40xi32>
    %40 = arith.xori %37, %39 : vector<1x16x40xi32>
    %c2146121005_i32 = arith.constant 2146121005 : i32
    %41 = vector.broadcast %c2146121005_i32 : i32 to vector<1x16x40xi32>
    %42 = arith.muli %40, %41 : vector<1x16x40xi32>
    %c15_i32 = arith.constant 15 : i32
    %43 = vector.broadcast %c15_i32 : i32 to vector<1x16x40xi32>
    %44 = arith.shrui %42, %43 : vector<1x16x40xi32>
    %45 = arith.xori %42, %44 : vector<1x16x40xi32>
    %c-2073254261_i32 = arith.constant -2073254261 : i32
    %46 = vector.broadcast %c-2073254261_i32 : i32 to vector<1x16x40xi32>
    %47 = arith.muli %45, %46 : vector<1x16x40xi32>
    %c16_i32_13 = arith.constant 16 : i32
    %48 = vector.broadcast %c16_i32_13 : i32 to vector<1x16x40xi32>
    %49 = arith.shrui %47, %48 : vector<1x16x40xi32>
    %50 = arith.xori %47, %49 : vector<1x16x40xi32>
    %c858993459_i32 = arith.constant 858993459 : i32
    %51 = vector.broadcast %c858993459_i32 : i32 to vector<1x16x40xi32>
    %52 = arith.cmpi uge, %50, %51 : vector<1x16x40xi32>
    %cst_14 = arith.constant 1.250000e+00 : f32
    %53 = vector.broadcast %cst_14 : f32 to vector<1x16x40xf32>
    %54 = arith.mulf %15, %53 : vector<1x16x40xf32>
    %cst_15 = arith.constant 0.000000e+00 : f32
    %55 = vector.broadcast %cst_15 : f32 to vector<1x16x40xf32>
    %56 = arith.select %52, %54, %55 : vector<1x16x40xi1>, vector<1x16x40xf32>
    "tpu.trace_start"() <{level = 10 : i32, message = "bqk,bkv->bqv"}> : () -> ()
    %cst_16 = arith.constant dense<0.000000e+00> : vector<1x16x8xf32>
    %57 = tpu.matmul %56, %2, %cst_16 {dimension_numbers = #tpu.dot_dimension_numbers<[2], [1], [1], [2], [0, 0, 0, 1, 1, 2], [0], [0]>} : vector<1x16x40xf32>, vector<1x40x8xf32>, vector<1x16x8xf32> -> vector<1x16x8xf32>
    "tpu.trace_stop"() : () -> ()
    %c0_17 = arith.constant 0 : index
    %c0_18 = arith.constant 0 : index
    %c0_19 = arith.constant 0 : index
    %58 = vector.load %arg6[%c0_17, %c0_18, %c0_19] : memref<1x16x8xf32, #tpu.memory_space<vmem>>, vector<1x16x8xf32>
    tpu.vector_store %arg6[%c0_17, %c0_18, %c0_19], %57 {strides = array<i32>} : memref<1x16x8xf32, #tpu.memory_space<vmem>>, vector<1x16x8xf32>,
    return
  }
  func.func @transform_0(%arg0: i32, %arg1: i32, %arg2: memref<1xi32, #tpu.memory_space<smem>>) -> (i32, i32, i32) {
    %c0_i32 = arith.constant 0 : i32
    %c0_i32_0 = arith.constant 0 : i32
    return %arg0, %arg1, %c0_i32 : i32, i32, i32
  }
  func.func @transform_1(%arg0: i32, %arg1: i32, %arg2: memref<1xi32, #tpu.memory_space<smem>>) -> (i32, i32, i32) {
    %c0_i32 = arith.constant 0 : i32
    %c0_i32_0 = arith.constant 0 : i32
    %c0_i32_1 = arith.constant 0 : i32
    return %arg0, %c0_i32, %c0_i32_0 : i32, i32, i32
  }
  func.func @transform_2(%arg0: i32, %arg1: i32, %arg2: memref<1xi32, #tpu.memory_space<smem>>) -> (i32, i32, i32) {
    %c0_i32 = arith.constant 0 : i32
    %c0_i32_0 = arith.constant 0 : i32
    %c0_i32_1 = arith.constant 0 : i32
    return %arg0, %c0_i32, %c0_i32_0 : i32, i32, i32
  }
  func.func @transform_3(%arg0: i32, %arg1: i32, %arg2: memref<1xi32, #tpu.memory_space<smem>>) -> (i32, i32, i32) {
    %c0_i32 = arith.constant 0 : i32
    %c0_i32_0 = arith.constant 0 : i32
    return %arg0, %arg1, %c0_i32 : i32, i32, i32
  }
}

</mosaic_0001>

<llo_original>
// kernel: tpu_custom_call.1
$region0: #{tpu_custom_call.1}
  #allocation0 [shape = 'u32[]', space=smem, size = 0x4, offset = 0x4, fixed_abs, tag = 'smem constant byte address 0x4 - core index']
  #allocation1 [shape = 'u32[144,128]{1,0:T(1,128)}', space=vmem, size = 0x12000, scoped, tag = 'internal scratch']
  #allocation2 [shape = 's32[1]{0}', space=sflag, size = 0x4, scoped, tag = 'scoped memory for tpu_custom_call.1']
  #allocation3 [shape = 's32[1]{0:T(128)S(6)}', space=smem, size = 0x200, scoped, tag = 'prefetched SMEM operand 0']
  %s0 = inlined_call_operand.<no memory space> [shape: s32[1], index: 0, kind: input, shape index: {}]
  %s1 = inlined_call_operand.vmem [shape: f32[1,30,4], index: 1, kind: input, shape index: {}]
  %s2 = inlined_call_operand.vmem [shape: f32[1,40,4], index: 2, kind: input, shape index: {}]
  %s3 = inlined_call_operand.vmem [shape: f32[1,40,8], index: 3, kind: input, shape index: {}]
  %s4 = inlined_call_operand.vmem [shape: f32[1,30,8], index: 4, kind: output, shape index: {}]
  %s5 = sld [smem:[#allocation0]]
  $region45: #{tpu_custom_call.1} parent=0
    _
  %s7 = ssub.s32 1, %s5
  %s8 = scalar_select 0, %s7, %s5
  %9 = sst [smem:[#allocation3]] %s0
  loop: start=0, step=1, limit=4
  $region2: #{tpu_custom_call.1} parent=0 // loop_pre_header
    _
  $region3: #{tpu_custom_call.1} parent=0 // loop_header
    %s11 = sphi 0, %s15
    %p12 = scmp.ge.s32.totalorder %s11, 4
    %s18 = sphi 0, %s30
    %s19 = sphi 0, %s26
    %s20 = sphi 0, %s18
    %s21 = sphi 0, %s19
    %s22 = sphi 0, %s20
    %s23 = sphi 0, %s21
    %s35 = sphi 0, %s37
    %s38 = sphi 0, %s35
    %s39 = sphi 0, %s38
    %s55 = sphi 0, %s39
    %s61 = sphi 0, %s63
    %s64 = sphi 0, %s61
    %s65 = sphi 0, %s64
    %s81 = sphi 0, %s65
    %s87 = sphi 0, %s89
    %s90 = sphi 0, %s87
    %s91 = sphi 0, %s90
    %s107 = sphi 0, %s91
    %s115 = sphi 0, %s117
    %s118 = sphi 0, %s115
    %s119 = sphi 0, %s118
    %s135 = sphi 0, %s119
  $region4: #{tpu_custom_call.1} parent=0 // loop_header_branch
    %14 = sbr.rel (%p12) target = $region8
  $region5: #{tpu_custom_call.1} parent=0 // loop_body
    %s16 = ssub.s32 %s11, 1
    %s17 = ssub.s32 %s11, 2
    %s24 = sadd.s32 1, %s19
    %p25 = scmp.ge.s32.totalorder %s24, 2
    %s26 = scalar_select %p25, 0, %s24
    %s27 = sadd.s32 1, %s18
    %s28 = scalar_select %p25, %s27, %s18
    %p29 = scmp.ge.s32.totalorder %s28, 1
    %s30 = scalar_select %p29, 0, %s28
    %s31 = ssub.s32 %s18, %s30
    %s32 = ssub.s32 %s19, %s26
    %s33 = sor.u32 %s31, %s32
    %p34 = scmp.eq.s32.totalorder %s33, 0
    %s36 = sadd.s32 %s35, 1
    %s37 = scalar_select %p34, %s35, %s36
    %p40 = pneg %p34
    %p41 = scmp.eq.s32.totalorder %s11, 1
    %p42 = por %p40, %p41
    %p43 = scmp.ne.s32.totalorder %s35, %s38
    %p44 = scmp.eq.s32.totalorder %s11, 0
    %p45 = por %p43, %p44
    %p46 = scmp.ne.s32.totalorder %s35, %s38
    %p47 = scmp.eq.s32.totalorder %s16, 1
    %p48 = por %p46, %p47
    %p49 = scmp.ne.s32.totalorder %s38, %s39
    %p50 = scmp.eq.s32.totalorder %s16, 0
    %p51 = por %p49, %p50
    %p52 = scmp.ne.s32.totalorder %s38, %s39
    %p53 = scmp.eq.s32.totalorder %s17, 1
    %p54 = por %p52, %p53
    %p56 = scmp.ne.s32.totalorder %s39, %s55
    %p57 = scmp.eq.s32.totalorder %s17, 0
    %p58 = por %p56, %p57
    %s59 = ssub.s32 %s18, %s30
    %p60 = scmp.eq.s32.totalorder %s59, 0
    %s62 = sadd.s32 %s61, 1
    %s63 = scalar_select %p60, %s61, %s62
    %p66 = pneg %p60
    %p67 = scmp.eq.s32.totalorder %s11, 1
    %p68 = por %p66, %p67
    %p69 = scmp.ne.s32.totalorder %s61, %s64
    %p70 = scmp.eq.s32.totalorder %s11, 0
    %p71 = por %p69, %p70
    %p72 = scmp.ne.s32.totalorder %s61, %s64
    %p73 = scmp.eq.s32.totalorder %s16, 1
    %p74 = por %p72, %p73
    %p75 = scmp.ne.s32.totalorder %s64, %s65
    %p76 = scmp.eq.s32.totalorder %s16, 0
    %p77 = por %p75, %p76
    %p78 = scmp.ne.s32.totalorder %s64, %s65
    %p79 = scmp.eq.s32.totalorder %s17, 1
    %p80 = por %p78, %p79
    %p82 = scmp.ne.s32.totalorder %s65, %s81
    %p83 = scmp.eq.s32.totalorder %s17, 0
    %p84 = por %p82, %p83
    %s85 = ssub.s32 %s18, %s30
    %p86 = scmp.eq.s32.totalorder %s85, 0
    %s88 = sadd.s32 %s87, 1
    %s89 = scalar_select %p86, %s87, %s88
    %p92 = pneg %p86
    %p93 = scmp.eq.s32.totalorder %s11, 1
    %p94 = por %p92, %p93
    %p95 = scmp.ne.s32.totalorder %s87, %s90
    %p96 = scmp.eq.s32.totalorder %s11, 0
    %p97 = por %p95, %p96
    %p98 = scmp.ne.s32.totalorder %s87, %s90
    %p99 = scmp.eq.s32.totalorder %s16, 1
    %p100 = por %p98, %p99
    %p101 = scmp.ne.s32.totalorder %s90, %s91
    %p102 = scmp.eq.s32.totalorder %s16, 0
    %p103 = por %p101, %p102
    %p104 = scmp.ne.s32.totalorder %s90, %s91
    %p105 = scmp.eq.s32.totalorder %s17, 1
    %p106 = por %p104, %p105
    %p108 = scmp.ne.s32.totalorder %s91, %s107
    %p109 = scmp.eq.s32.totalorder %s17, 0
    %p110 = por %p108, %p109
    %s111 = ssub.s32 %s18, %s30
    %s112 = ssub.s32 %s19, %s26
    %s113 = sor.u32 %s111, %s112
    %p114 = scmp.eq.s32.totalorder %s113, 0
    %s116 = sadd.s32 %s115, 1
    %s117 = scalar_select %p114, %s115, %s116
    %p120 = pneg %p114
    %p121 = scmp.eq.s32.totalorder %s11, 1
    %p122 = por %p120, %p121
    %p123 = scmp.ne.s32.totalorder %s115, %s118
    %p124 = scmp.eq.s32.totalorder %s11, 0
    %p125 = por %p123, %p124
    %p126 = scmp.ne.s32.totalorder %s115, %s118
    %p127 = scmp.eq.s32.totalorder %s16, 1
    %p128 = por %p126, %p127
    %p129 = scmp.ne.s32.totalorder %s118, %s119
    %p130 = scmp.eq.s32.totalorder %s16, 0
    %p131 = por %p129, %p130
    %p132 = scmp.ne.s32.totalorder %s118, %s119
    %p133 = scmp.eq.s32.totalorder %s17, 1
    %p134 = por %p132, %p133
    %p136 = scmp.ne.s32.totalorder %s119, %s135
    %p137 = scmp.eq.s32.totalorder %s17, 0
    %p138 = por %p136, %p137
    %p139 = scmp.le.s32.totalorder 1, %s11
    %p140 = scmp.lt.s32.totalorder %s11, 3
    %p141 = pnand %p139, %p140
    %p142 = pneg %p141
    // Predicated region
    $region9: #{tpu_custom_call.1} parent=5 // pred_check
      _
    $region10: #{tpu_custom_call.1} parent=5 // pred_check_branch
      %144 = sbr.rel (%p141) target = $region12
    $region11: #{tpu_custom_call.1} parent=5 // pred_region
      %s145 = ssub.s32 %s11, 1
      // Predicated region
      $region13: #{tpu_custom_call.1} parent=11 // pred_check
        %p146 = pneg %p77
      $region14: #{tpu_custom_call.1} parent=11 // pred_check_branch
        %148 = sbr.rel (%p146) target = $region16
      $region15: #{tpu_custom_call.1} parent=11 // pred_region
        %p149 = scmp.lt.s32.totalorder %s20, 0
        %s150 = scalar_select %p149, %s20, 0
        %s151 = smul.addr %s150, 5
        %s152 = smul.addr %s151, 8
        %s153 = scalar_lea.vmem %s2, %s152
      $region16: #{tpu_custom_call.1} parent=11 // pred_fallthru
        _
      // Predicated region
      $region17: #{tpu_custom_call.1} parent=11 // pred_check
        %p154 = pneg %p103
      $region18: #{tpu_custom_call.1} parent=11 // pred_check_branch
        %156 = sbr.rel (%p154) target = $region20
      $region19: #{tpu_custom_call.1} parent=11 // pred_region
        %p157 = scmp.lt.s32.totalorder %s20, 0
        %s158 = scalar_select %p157, %s20, 0
        %s159 = smul.addr %s158, 5
        %s160 = smul.addr %s159, 8
        %s161 = scalar_lea.vmem %s3, %s160
      $region20: #{tpu_custom_call.1} parent=11 // pred_fallthru
        _
    $region12: #{tpu_custom_call.1} parent=5 // pred_fallthru
      _
    %p162 = scmp.lt.s32.totalorder %s11, 2
    // Predicated region
    $region21: #{tpu_custom_call.1} parent=5 // pred_check
      %p163 = pneg %p162
    $region22: #{tpu_custom_call.1} parent=5 // pred_check_branch
      %165 = sbr.rel (%p163) target = $region24
    $region23: #{tpu_custom_call.1} parent=5 // pred_region
      // Predicated region
      $region25: #{tpu_custom_call.1} parent=23 // pred_check
        %p166 = pneg %p45
      $region26: #{tpu_custom_call.1} parent=23 // pred_check_branch
        %168 = sbr.rel (%p166) target = $region28
      $region27: #{tpu_custom_call.1} parent=23 // pred_region
        %s169 = smul.u32 2, %s19
        %p170 = scmp.lt.s32.totalorder %s18, 0
        %s171 = scalar_select %p170, %s18, 0
        %p172 = scmp.lt.s32.totalorder %s169, 3
        %s173 = scalar_select %p172, %s169, 3
        %s174 = smul.addr %s171, 4
        %s175 = sadd.s32 %s173, %s174
        %s176 = smul.addr %s175, 8
        %s177 = scalar_lea.vmem %s1, %s176
        %s178 = smul.u32 2, %s19
      $region28: #{tpu_custom_call.1} parent=23 // pred_fallthru
        _
    $region24: #{tpu_custom_call.1} parent=5 // pred_fallthru
      _
    %p179 = scmp.le.s32.totalorder 1, %s11
    %p180 = scmp.lt.s32.totalorder %s11, 3
    %p181 = pnand %p179, %p180
    %p182 = pneg %p181
    // Predicated region
    $region29: #{tpu_custom_call.1} parent=5 // pred_check
      _
    $region30: #{tpu_custom_call.1} parent=5 // pred_check_branch
      %184 = sbr.rel (%p181) target = $region32
    $region31: #{tpu_custom_call.1} parent=5 // pred_region
      %s185 = ssub.s32 %s11, 1
      %s186 = smul.u32 2, %s21
      %p187 = scmp.lt.s32.totalorder %s20, 0
      %s188 = scalar_select %p187, %s20, 0
      %p189 = scmp.lt.s32.totalorder %s186, 3
      %s190 = scalar_select %p189, %s186, 3
      %s191 = smul.addr %s188, 4
      %s192 = sadd.s32 %s190, %s191
      %s193 = smul.addr %s192, 8
      %s194 = scalar_lea.vmem %s1, %s193
      %p195 = pneg %p51
      %p196 = pneg %p48
      %p197 = scmp.lt.s32.totalorder %s20, 0
      %s198 = scalar_select %p197, %s20, 0
      %s199 = smul.addr %s198, 5
      %s200 = smul.addr %s199, 8
      %s201 = scalar_lea.vmem %s2, %s200
      %p202 = pneg %p77
      %p203 = pneg %p74
      %p204 = scmp.lt.s32.totalorder %s20, 0
      %s205 = scalar_select %p204, %s20, 0
      %s206 = smul.addr %s205, 5
      %s207 = smul.addr %s206, 8
      %s208 = scalar_lea.vmem %s3, %s207
      %p209 = pneg %p103
      %p210 = pneg %p100
      %p211 = pneg %p131
      %p212 = pneg %p128
      %s213 = smul.u32 2, %s21
      %p214 = scmp.lt.s32.totalorder %s20, 0
      %s215 = scalar_select %p214, %s20, 0
      %p216 = scmp.lt.s32.totalorder %s213, 3
      %s217 = scalar_select %p216, %s213, 3
      %s218 = smul.addr %s215, 4
      %s219 = sadd.s32 %s217, %s218
      %s220 = smul.addr %s219, 8
      %s221 = scalar_lea.vmem %s4, %s220
      %s222 = smul.u32 2, %s21
      %p223 = scmp.lt.s32.totalorder %s20, 0
      %s224 = scalar_select %p223, %s20, 0
      %p225 = scmp.lt.s32.totalorder %s222, 3
      %s226 = scalar_select %p225, %s222, 3
      %s227 = smul.addr %s224, 4
      %s228 = sadd.s32 %s226, %s227
      %s229 = smul.addr %s228, 8
      %s230 = scalar_lea.vmem %s1, %s229
      %s231 = smul.u32 2, %s21
      %p232 = scmp.lt.s32.totalorder %s20, 0
      %s233 = scalar_select %p232, %s20, 0
      %s234 = smul.addr %s233, 5
      %s235 = smul.addr %s234, 8
      %s236 = scalar_lea.vmem %s2, %s235
      %p237 = scmp.lt.s32.totalorder %s20, 0
      %s238 = scalar_select %p237, %s20, 0
      %s239 = smul.addr %s238, 5
      %s240 = smul.addr %s239, 8
      %s241 = scalar_lea.vmem %s3, %s240
      %s242 = smul.u32 2, %s21
      %p243 = scmp.lt.s32.totalorder %s20, 0
      %s244 = scalar_select %p243, %s20, 0
      %p245 = scmp.lt.s32.totalorder %s242, 3
      %s246 = scalar_select %p245, %s242, 3
      %s247 = smul.addr %s244, 4
      %s248 = sadd.s32 %s246, %s247
      %s249 = smul.addr %s248, 8
      %s250 = scalar_lea.vmem %s4, %s249
      %s251 = smul.u32 2, %s21
      %v252 = vld [vmem:[%s230] sm:$0xff]
      %v253 = vld [vmem:[%s230 + $0x8] sm:$0xff]
      %v254 = vld [vmem:[%s236] sm:$0xff]
      %v255 = vld [vmem:[%s236 + $0x8] sm:$0xff]
      %v256 = vld [vmem:[%s236 + $0x10] sm:$0xff]
      %v257 = vld [vmem:[%s236 + $0x18] sm:$0xff]
      %v258 = vld [vmem:[%s236 + $0x20] sm:$0xff]
      %v259 = vld [vmem:[%s241] sm:$0xff]
      %v260 = vld [vmem:[%s241 + $0x8] sm:$0xff]
      %v261 = vld [vmem:[%s241 + $0x10] sm:$0xff]
      %v262 = vld [vmem:[%s241 + $0x18] sm:$0xff]
      %v263 = vld [vmem:[%s241 + $0x20] sm:$0xff]
      %vm264 = vcmask 31744
      %v266 = vsel %vm264, %v252, 0
      %v269 = vsel %vm264, %v253, 0
      %v272 = vsel %vm264, %v254, 0
      %v275 = vsel %vm264, %v255, 0
      %v278 = vsel %vm264, %v256, 0
      %v281 = vsel %vm264, %v257, 0
      %v284 = vsel %vm264, %v258, 0
      %286 = vmatprep.subr.mxu0 0.0
      %287 = vmatpush1.xpose.msra.mxu0 0.0
      %288 = vmatprep.subr.mxu0 0.0
      %289 = vmatpush1.xpose.msra.mxu0 0.0
      %290 = vmatprep.subr.mxu0 0.0
      %291 = vmatpush1.xpose.msra.mxu0 0.0
      %292 = vmatprep.subr.mxu0 0.0
      %293 = vmatpush1.xpose.msra.mxu0 0.0
      %294 = vmatprep.subr.mxu0 0.0
      %295 = vmatpush1.xpose.msra.mxu0 0.0
      %296 = vmatprep.subr.mxu0 0.0
      %297 = vmatpush1.xpose.msra.mxu0 0.0
      %298 = vmatprep.subr.mxu0 0.0
      %299 = vmatpush1.xpose.msra.mxu0 0.0
      %300 = vmatprep.subr.mxu0 0.0
      %301 = vmatpush1.xpose.msra.mxu0 0.0
      %302 = vmatprep.subr.mxu0 0.0
      %303 = vmatpush1.xpose.msra.mxu0 0.0
      %304 = vmatprep.subr.mxu0 0.0
      %305 = vmatpush1.xpose.msra.mxu0 0.0
      %306 = vmatprep.subr.mxu0 0.0
      %307 = vmatpush1.xpose.msra.mxu0 0.0
      %308 = vmatprep.subr.mxu0 0.0
      %309 = vmatpush1.xpose.msra.mxu0 %v284
      %310 = vmatprep.subr.mxu0 0.0
      %311 = vmatpush1.xpose.msra.mxu0 %v281
      %312 = vmatprep.subr.mxu0 0.0
      %313 = vmatpush1.xpose.msra.mxu0 %v278
      %314 = vmatprep.subr.mxu0 0.0
      %315 = vmatpush1.xpose.msra.mxu0 %v275
      %316 = vmatprep.subr.mxu0 0.0
      %317 = vmatpush1.xpose.msra.mxu0 %v272
      %318 = vmatprep.subr.mxu0 0.0
      %319 = vmatpush2.xpose.msra.mxu0 0.0
      %320 = vmatprep.subr.mxu0 0.0
      %321 = vmatpush2.xpose.msra.mxu0 0.0
      %322 = vmatprep.subr.mxu0 0.0
      %323 = vmatpush2.xpose.msra.mxu0 0.0
      %324 = vmatprep.subr.mxu0 0.0
      %325 = vmatpush2.xpose.msra.mxu0 0.0
      %326 = vmatprep.subr.mxu0 0.0
      %327 = vmatpush2.xpose.msra.mxu0 0.0
      %328 = vmatprep.subr.mxu0 0.0
      %329 = vmatpush2.xpose.msra.mxu0 0.0
      %330 = vmatprep.subr.mxu0 0.0
      %331 = vmatpush2.xpose.msra.mxu0 0.0
      %332 = vmatprep.subr.mxu0 0.0
      %333 = vmatpush2.xpose.msra.mxu0 0.0
      %334 = vmatprep.subr.mxu0 0.0
      %335 = vmatpush2.xpose.msra.mxu0 0.0
      %336 = vmatprep.subr.mxu0 0.0
      %337 = vmatpush2.xpose.msra.mxu0 0.0
      %338 = vmatprep.subr.mxu0 0.0
      %339 = vmatpush2.xpose.msra.mxu0 0.0
      %340 = vmatprep.subr.mxu0 0.0
      %341 = vmatpush2.xpose.msra.mxu0 0.0
      %342 = vmatprep.subr.mxu0 0.0
      %343 = vmatpush2.xpose.msra.mxu0 0.0
      %344 = vmatprep.subr.mxu0 0.0
      %345 = vmatpush2.xpose.msra.mxu0 0.0
      %346 = vmatprep.subr.mxu0 0.0
      %347 = vmatpush2.xpose.msra.mxu0 0.0
      %348 = vmatprep.subr.mxu0 0.0
      %349 = vmatpush2.xpose.msra.mxu0 0.0
      %350 = vmatprep.mubr.f32.mxu0 0.0
      %351 = vmatmul.mubr.f32.gmra.mxu0 %v266
      %v352 = vpop.f32.mrf.mxu0
      %v353 = vadd.f32 0.0, %v352
      %v354 = vpop.f32.mrf.mxu0
      %355 = vmatprep.mubr.f32.mxu0 0.0
      %356 = vmatmul.mubr.f32.gmra.mxu0 %v269
      %v357 = vpop.f32.mrf.mxu0
      %v358 = vadd.f32 0.0, %v357
      %v359 = vpop.f32.mrf.mxu0
      %360 = vdwg.mxu0
      %vm361 = vcmask 326656
      %v362 = vsel %vm361, %v353, -inf
      %363 = vmax.xlane.f32.xlu0 %v362
      %v364 = vpop.xlane.xlu0 %363
      %v365 = vsel %vm361, %v358, -inf
      %366 = vmax.xlane.f32.xlu0 %v365
      %v367 = vpop.xlane.xlu0 %366
      %v368 = vsub.f32 %v353, %v364
      %v369 = vsub.f32 %v358, %v367
      %v370 = vmul.f32 %v368, 1.442695
      %v371 = vpow.pop %v370
      %v372 = vmul.f32 %v369, 1.442695
      %v373 = vpow.pop %v372
      %v374 = vsel %vm361, %v371, 0.0
      %375 = vadd.xlane.f32.xlu0 %v374
      %v376 = vpop.xlane.xlu0 %375
      %v377 = vsel %vm361, %v373, 0.0
      %378 = vadd.xlane.f32.xlu0 %v377
      %v379 = vpop.xlane.xlu0 %378
      %v380 = vrcp.pop %v376
      %v381 = vrcp.pop %v379
      %v382 = vmul.f32 %v371, %v380
      %v383 = vmul.f32 %v373, %v381
      %s384 = sld [smem:[#allocation3]]
      %s385 = smul.u32 %s21, 16
      %v386 = vlaneseq
      %v387 = vshrl.u32 %v386, 7
      %v388 = vadd.s32 %v387, 8
      %v389 = vlaneseq
      %v390 = vand.u32 %v389, 127
      %v391 = vstv %s20
      %v392 = vmul.u32 %v391, 30
      %v393 = vstv %s385
      %v394 = vadd.s32 %v393, %v387
      %v395 = vadd.s32 %v393, %v388
      %v396 = vadd.s32 %v392, %v394
      %v397 = vadd.s32 %v392, %v395
      %v398 = vmul.u32 %v396, 40
      %v399 = vmul.u32 %v397, 40
      %v400 = vadd.s32 %v398, %v390
      %v401 = vadd.s32 %v399, %v390
      %s402 = smul.u32 %s384, 2654435769
      %v403 = vstv %s402
      %v404 = vadd.s32 %v400, %v403
      %v405 = vadd.s32 %v401, %v403
      %v406 = vshrl.u32 %v404, 16
      %v407 = vshrl.u32 %v405, 16
      %v408 = vxor.u32 %v404, %v406
      %v409 = vxor.u32 %v405, %v407
      %v410 = vmul.u32 %v408, 2146121005
      %v411 = vmul.u32 %v409, 2146121005
      %v412 = vshrl.u32 %v410, 15
      %v413 = vshrl.u32 %v411, 15
      %v414 = vxor.u32 %v410, %v412
      %v415 = vxor.u32 %v411, %v413
      %v416 = vmul.u32 %v414, 2221713035
      %v417 = vmul.u32 %v415, 2221713035
      %v418 = vshrl.u32 %v416, 16
      %v419 = vshrl.u32 %v417, 16
      %v420 = vxor.u32 %v416, %v418
      %v421 = vxor.u32 %v417, %v419
      %vm422 = vcmp.ge.u32.totalorder %v420, 858993459
      %vm423 = vcmp.ge.u32.totalorder %v421, 858993459
      %v424 = vmul.f32 %v382, 1.25
      %v425 = vmul.f32 %v383, 1.25
      %v426 = vsel %vm422, %v424, 0.0
      %v427 = vsel %vm423, %v425, 0.0
      %v429 = vsel %vm361, %v426, 0
      %v432 = vsel %vm361, %v427, 0
      %434 = vmatprep.subr.mxu0 0.0
      %435 = vmatpush1.msra.mxu0 0.0
      %436 = vmatprep.subr.mxu0 0.0
      %437 = vmatpush1.msra.mxu0 0.0
      %438 = vmatprep.subr.mxu0 0.0
      %439 = vmatpush1.msra.mxu0 0.0
      %440 = vmatprep.subr.mxu0 0.0
      %441 = vmatpush1.msra.mxu0 0.0
      %442 = vmatprep.subr.mxu0 0.0
      %443 = vmatpush1.msra.mxu0 0.0
      %444 = vmatprep.subr.mxu0 0.0
      %445 = vmatpush1.msra.mxu0 0.0
      %446 = vmatprep.subr.mxu0 0.0
      %447 = vmatpush1.msra.mxu0 0.0
      %448 = vmatprep.subr.mxu0 0.0
      %449 = vmatpush1.msra.mxu0 0.0
      %450 = vmatprep.subr.mxu0 0.0
      %451 = vmatpush1.msra.mxu0 0.0
      %452 = vmatprep.subr.mxu0 0.0
      %453 = vmatpush1.msra.mxu0 0.0
      %454 = vmatprep.subr.mxu0 0.0
      %455 = vmatpush1.msra.mxu0 0.0
      %456 = vmatprep.subr.mxu0 0.0
      %457 = vmatpush1.msra.mxu0 %v263
      %458 = vmatprep.subr.mxu0 0.0
      %459 = vmatpush1.msra.mxu0 %v262
      %460 = vmatprep.subr.mxu0 0.0
      %461 = vmatpush1.msra.mxu0 %v261
      %462 = vmatprep.subr.mxu0 0.0
      %463 = vmatpush1.msra.mxu0 %v260
      %464 = vmatprep.subr.mxu0 0.0
      %465 = vmatpush1.msra.mxu0 %v259
      %466 = vmatprep.subr.mxu0 0.0
      %467 = vmatpush2.msra.mxu0 0.0
      %468 = vmatprep.subr.mxu0 0.0
      %469 = vmatpush2.msra.mxu0 0.0
      %470 = vmatprep.subr.mxu0 0.0
      %471 = vmatpush2.msra.mxu0 0.0
      %472 = vmatprep.subr.mxu0 0.0
      %473 = vmatpush2.msra.mxu0 0.0
      %474 = vmatprep.subr.mxu0 0.0
      %475 = vmatpush2.msra.mxu0 0.0
      %476 = vmatprep.subr.mxu0 0.0
      %477 = vmatpush2.msra.mxu0 0.0
      %478 = vmatprep.subr.mxu0 0.0
      %479 = vmatpush2.msra.mxu0 0.0
      %480 = vmatprep.subr.mxu0 0.0
      %481 = vmatpush2.msra.mxu0 0.0
      %482 = vmatprep.subr.mxu0 0.0
      %483 = vmatpush2.msra.mxu0 0.0
      %484 = vmatprep.subr.mxu0 0.0
      %485 = vmatpush2.msra.mxu0 0.0
      %486 = vmatprep.subr.mxu0 0.0
      %487 = vmatpush2.msra.mxu0 0.0
      %488 = vmatprep.subr.mxu0 0.0
      %489 = vmatpush2.msra.mxu0 0.0
      %490 = vmatprep.subr.mxu0 0.0
      %491 = vmatpush2.msra.mxu0 0.0
      %492 = vmatprep.subr.mxu0 0.0
      %493 = vmatpush2.msra.mxu0 0.0
      %494 = vmatprep.subr.mxu0 0.0
      %495 = vmatpush2.msra.mxu0 0.0
      %496 = vmatprep.subr.mxu0 0.0
      %497 = vmatpush2.msra.mxu0 0.0
      %498 = vmatprep.mubr.f32.mxu0 0.0
      %499 = vmatmul.mubr.f32.gmra.mxu0 %v429
      %v500 = vpop.f32.mrf.mxu0
      %v501 = vadd.f32 0.0, %v500
      %v502 = vpop.f32.mrf.mxu0
      %503 = vmatprep.mubr.f32.mxu0 0.0
      %504 = vmatmul.mubr.f32.gmra.mxu0 %v432
      %v505 = vpop.f32.mrf.mxu0
      %v506 = vadd.f32 0.0, %v505
      %v507 = vpop.f32.mrf.mxu0
      %508 = vdwg.mxu0
      %vm509 = vcmask 64512
      %510 = vst.msk [vmem:[%s250] sm:$0xff] %vm509, %v501
      %511 = vst.msk [vmem:[%s250 + $0x8] sm:$0xff] %vm509, %v506
      %s512 = smul.u32 2, %s21
      %p513 = scmp.lt.s32.totalorder %s20, 0
      %s514 = scalar_select %p513, %s20, 0
      %p515 = scmp.lt.s32.totalorder %s512, 3
      %s516 = scalar_select %p515, %s512, 3
      %s517 = smul.addr %s514, 4
      %s518 = sadd.s32 %s516, %s517
      %s519 = smul.addr %s518, 8
      %s520 = scalar_lea.vmem %s4, %s519
      // Predicated region
      $region33: #{tpu_custom_call.1} parent=31 // pred_check
        %p521 = pneg %p128
      $region34: #{tpu_custom_call.1} parent=31 // pred_check_branch
        %523 = sbr.rel (%p521) target = $region36
      $region35: #{tpu_custom_call.1} parent=31 // pred_region
        %s524 = smul.u32 2, %s21
      $region36: #{tpu_custom_call.1} parent=31 // pred_fallthru
        _
    $region32: #{tpu_custom_call.1} parent=5 // pred_fallthru
      _
    %p525 = scmp.le.s32.totalorder 2, %s11
    // Predicated region
    $region37: #{tpu_custom_call.1} parent=5 // pred_check
      %p526 = pneg %p525
    $region38: #{tpu_custom_call.1} parent=5 // pred_check_branch
      %528 = sbr.rel (%p526) target = $region40
    $region39: #{tpu_custom_call.1} parent=5 // pred_region
      %s529 = ssub.s32 %s11, 2
      // Predicated region
      $region41: #{tpu_custom_call.1} parent=39 // pred_check
        %p530 = pneg %p134
      $region42: #{tpu_custom_call.1} parent=39 // pred_check_branch
        %532 = sbr.rel (%p530) target = $region44
      $region43: #{tpu_custom_call.1} parent=39 // pred_region
        %s533 = smul.u32 2, %s23
        %p534 = scmp.lt.s32.totalorder %s22, 0
        %s535 = scalar_select %p534, %s22, 0
        %p536 = scmp.lt.s32.totalorder %s533, 3
        %s537 = scalar_select %p536, %s533, 3
        %s538 = smul.addr %s535, 4
        %s539 = sadd.s32 %s537, %s538
        %s540 = smul.addr %s539, 8
        %s541 = scalar_lea.vmem %s4, %s540
      $region44: #{tpu_custom_call.1} parent=39 // pred_fallthru
        _
    $region40: #{tpu_custom_call.1} parent=5 // pred_fallthru
      _
  $region6: #{tpu_custom_call.1} parent=0 // loop_footer
    %s15 = sadd.s32 1, %s11
  $region7: #{tpu_custom_call.1} parent=0 // loop_footer_branch
    %10 = sbr.rel target = $region3
  $region8: #{tpu_custom_call.1} parent=0 // loop_exit
    _

</llo_original>
